<compile_context>
chip_gen: v5e
topology: v5e:2x2
jax: 0.10.0
libtpu: 0.0.40
codegen_flags: <defaults>
</compile_context>

<pallas_src>
import functools

import jax
import jax.numpy as jnp
from jax.experimental import pallas as pl
from jax.experimental.pallas import tpu as pltpu

# Problem sizes implied by the module (UCLA graduate-admissions dataset):
INPUT_SIZE = 7      # GRE, TOEFL, Univ rating, SOP, LOR, CGPA, Research
OUTPUT_SIZE = 2     # admit / no-admit
HIDDEN_SIZE = 32
ACTIVATION = "relu"  # matches default activation_fn='relu'

LANE = 128
SUBLANE = 8
DEFAULT_BATCH_TILE = 1024   # rows per grid step (large tiles amortize per-step overhead)


def _pad_to(n, m):
    return ((n + m - 1) // m) * m


def _activation(x, kind):
    if kind == "relu":
        return jnp.maximum(x, 0.0)
    if kind == "sigmoid":
        return jax.nn.sigmoid(x)
    if kind == "tanh":
        return jnp.tanh(x)
    raise ValueError(kind)


def mlp_kernel(x_ref, w1_ref, b1_ref, w2_ref, b2_ref, w3_ref, b3_ref, o_ref,
               *, activation):
    x = x_ref[...]
    h1 = _activation(
        jnp.dot(x, w1_ref[...], preferred_element_type=jnp.float32) + b1_ref[...],
        activation)
    h2 = _activation(
        jnp.dot(h1.astype(w2_ref.dtype), w2_ref[...],
                preferred_element_type=jnp.float32) + b2_ref[...],
        activation)
    # TODO(synk): nn.Dropout(0.2) (apply_dropout=True) not applied -- eval-mode semantics.
    logits = (jnp.dot(h2.astype(w3_ref.dtype), w3_ref[...],
                      preferred_element_type=jnp.float32) + b3_ref[...])
    # log_softmax over the (unpadded) real output lanes, in f32.
    m = jnp.max(logits, axis=-1, keepdims=True)
    lse = jnp.log(jnp.sum(jnp.exp(logits - m), axis=-1, keepdims=True)) + m
    o_ref[...] = logits - lse


def prepare_params(params, compute_dtype=jnp.float32):
    """Pad weights/biases to TPU-friendly shapes ONCE (hoisted off the hot path).

    Only the hidden dimension is padded (to 128 lanes); the input feature dim (7)
    and output dim (2) are kept at their true sizes — their BlockSpec dims equal
    the full array dims, which is a legal Mosaic layout and cuts HBM traffic.
    Weights stored as (in_features, out_features) so each layer is x @ W + b.
    Matmul operands may be bf16; biases / softmax math stay f32.
    """
    w1, b1, w2, b2, w3, b3 = params
    in_f, hid = w1.shape
    out_f = w3.shape[1]
    hid_p = _pad_to(hid, LANE)

    dt = compute_dtype
    w1p = jnp.zeros((in_f, hid_p), dt).at[:, :hid].set(w1.astype(dt))
    b1p = jnp.zeros((1, hid_p), jnp.float32).at[:, :hid].set(b1[None, :])
    w2p = jnp.zeros((hid_p, hid_p), dt).at[:hid, :hid].set(w2.astype(dt))
    b2p = jnp.zeros((1, hid_p), jnp.float32).at[:, :hid].set(b2[None, :])
    w3p = jnp.zeros((hid_p, out_f), dt).at[:hid, :].set(w3.astype(dt))
    b3p = b3[None, :].astype(jnp.float32)
    return (w1p, b1p, w2p, b2p, w3p, b3p)


@functools.partial(jax.jit, static_argnames=("activation", "batch_tile"))
def net_forward(x, padded_params, *, activation=ACTIVATION,
                batch_tile=DEFAULT_BATCH_TILE):
    """x: (B, in_features) float32. Returns (B, out_features) log-probs."""
    w1p, b1p, w2p, b2p, w3p, b3p = padded_params
    compute_dtype = w1p.dtype
    B, in_f = x.shape
    hid_p = w1p.shape[1]
    out_f = w3p.shape[1]

    # Batch rounded to a sublane multiple.
    B8 = _pad_to(max(B, SUBLANE), SUBLANE)
    # Tile: multiple of 8, capped by the user tile, and chosen so the grid has
    # >=2 steps whenever the batch allows it (keeps both v7x TensorCores busy).
    half = max(SUBLANE, _pad_to((B8 + 1) // 2, SUBLANE))
    tb = max(SUBLANE, min(_pad_to(batch_tile, SUBLANE), half))
    Bp = _pad_to(B8, tb)
    num_tiles = Bp // tb

    # Only a (cheap) batch-dim pad per call — no lane padding of the features.
    xp = x.astype(compute_dtype)
    if Bp > B:
        xp = jnp.pad(xp, ((0, Bp - B), (0, 0)))

    def const_spec(shape):
        return pl.BlockSpec(shape, lambda i: (0, 0))   # VMEM-resident across steps

    out_padded = pl.pallas_call(
        functools.partial(mlp_kernel, activation=activation),
        out_shape=jax.ShapeDtypeStruct((Bp, out_f), jnp.float32),
        grid_spec=pltpu.PrefetchScalarGridSpec(
            num_scalar_prefetch=0,
            grid=(num_tiles,),
            in_specs=[
                pl.BlockSpec((tb, in_f), lambda i: (i, 0)),   # x: tiled over batch
                const_spec((in_f, hid_p)), const_spec((1, hid_p)),
                const_spec((hid_p, hid_p)), const_spec((1, hid_p)),
                const_spec((hid_p, out_f)), const_spec((1, out_f)),
            ],
            out_specs=pl.BlockSpec((tb, out_f), lambda i: (i, 0)),
        ),
        compiler_params=pltpu.CompilerParams(
            dimension_semantics=("parallel",)),   # megacore sharding on v7x
    )(xp, w1p, b1p, w2p, b2p, w3p, b3p)

    return out_padded[:B] if Bp > B else out_padded


def init_params(key, input_size, hidden_size, output_size):
    """Deterministic init mimicking nn.Linear (uniform +/- 1/sqrt(fan_in))."""
    ks = jax.random.split(key, 6)

    def linear(kw, kb, fan_in, fan_out):
        bound = 1.0 / jnp.sqrt(fan_in)
        w = jax.random.uniform(kw, (fan_in, fan_out), jnp.float32, -bound, bound)
        b = jax.random.uniform(kb, (fan_out,), jnp.float32, -bound, bound)
        return w, b

    w1, b1 = linear(ks[0], ks[1], input_size, hidden_size)
    w2, b2 = linear(ks[2], ks[3], hidden_size, hidden_size)
    w3, b3 = linear(ks[4], ks[5], hidden_size, output_size)
    return (w1, b1, w2, b2, w3, b3)


def reference_forward(x, params, activation=ACTIVATION):
    w1, b1, w2, b2, w3, b3 = params
    h1 = _activation(x @ w1 + b1, activation)
    h2 = _activation(h1 @ w2 + b2, activation)
    logits = h2 @ w3 + b3
    return jax.nn.log_softmax(logits, axis=-1)


if __name__ == "__main__":
    key = jax.random.PRNGKey(0)
    kx, kp, kx2 = jax.random.split(key, 3)

    params = init_params(kp, INPUT_SIZE, HIDDEN_SIZE, OUTPUT_SIZE)
    # Pad weights ONCE (hoisted out of the per-call path). f32 for exact parity.
    padded_params = prepare_params(params)

    # Small batch (single grid step).
    batch = 8
    x = jax.random.normal(kx, (batch, INPUT_SIZE), jnp.float32)
    out = jax.block_until_ready(net_forward(x, padded_params))
    ref = reference_forward(x, params)
    assert out.shape == (batch, OUTPUT_SIZE)
    assert jnp.allclose(out, ref, atol=1e-4, rtol=1e-4), "small-batch mismatch vs reference"

    # Larger batch: batch_tile=500 exercises the sublane-rounding robustness fix
    # (500 -> 504) and yields a 2-step parallel grid (megacore-splittable on v7x).
    big_batch = 1000
    xb = jax.random.normal(kx2, (big_batch, INPUT_SIZE), jnp.float32)
    outb = jax.block_until_ready(net_forward(xb, padded_params, batch_tile=500))
    refb = reference_forward(xb, params)
    assert outb.shape == (big_batch, OUTPUT_SIZE)
    assert jnp.allclose(outb, refb, atol=1e-4, rtol=1e-4), "big-batch mismatch vs reference"

    print("KERNEL_OK")
</pallas_src>

<mosaic_0001>
module attributes {stable_mosaic.version = 11 : i64} {
  func.func @mlp_kernel(%arg0: i32, %arg1: memref<8x7xf32, #tpu.memory_space<vmem>>, %arg2: memref<7x128xf32, #tpu.memory_space<vmem>>, %arg3: memref<1x128xf32, #tpu.memory_space<vmem>>, %arg4: memref<128x128xf32, #tpu.memory_space<vmem>>, %arg5: memref<1x128xf32, #tpu.memory_space<vmem>>, %arg6: memref<128x2xf32, #tpu.memory_space<vmem>>, %arg7: memref<1x2xf32, #tpu.memory_space<vmem>>, %arg8: memref<8x2xf32, #tpu.memory_space<vmem>>) attributes {dimension_semantics = [#tpu.dimension_semantics<parallel>], iteration_bounds = array<i64: 1>, scalar_prefetch = 0 : i64, scratch_operands = 0 : i64, tpu.core_type = #tpu.core_type<tc>, window_params = [{transform_indices = @transform_0, window_bounds = array<i64: 8, 7>}, {pipeline_mode = #tpu.pipeline_mode<synchronous>, transform_indices = @transform_1, window_bounds = array<i64: 7, 128>}, {pipeline_mode = #tpu.pipeline_mode<synchronous>, transform_indices = @transform_2, window_bounds = array<i64: 1, 128>}, {pipeline_mode = #tpu.pipeline_mode<synchronous>, transform_indices = @transform_3, window_bounds = array<i64: 128, 128>}, {pipeline_mode = #tpu.pipeline_mode<synchronous>, transform_indices = @transform_4, window_bounds = array<i64: 1, 128>}, {pipeline_mode = #tpu.pipeline_mode<synchronous>, transform_indices = @transform_5, window_bounds = array<i64: 128, 2>}, {pipeline_mode = #tpu.pipeline_mode<synchronous>, transform_indices = @transform_6, window_bounds = array<i64: 1, 2>}, {transform_indices = @transform_7, window_bounds = array<i64: 8, 2>}]} {
    %c0 = arith.constant 0 : index
    %c0_0 = arith.constant 0 : index
    %0 = vector.load %arg1[%c0, %c0_0] : memref<8x7xf32, #tpu.memory_space<vmem>>, vector<8x7xf32>
    %c0_1 = arith.constant 0 : index
    %c0_2 = arith.constant 0 : index
    %1 = vector.load %arg2[%c0_1, %c0_2] : memref<7x128xf32, #tpu.memory_space<vmem>>, vector<7x128xf32>
    %cst = arith.constant dense<0.000000e+00> : vector<8x128xf32>
    %2 = tpu.matmul %0, %1, %cst {dimension_numbers = #tpu.dot_dimension_numbers<[1], [0], [0], [1], [0, 0, 1, 1], [], []>} : vector<8x7xf32>, vector<7x128xf32>, vector<8x128xf32> -> vector<8x128xf32>
    %c0_3 = arith.constant 0 : index
    %c0_4 = arith.constant 0 : index
    %3 = vector.load %arg3[%c0_3, %c0_4] : memref<1x128xf32, #tpu.memory_space<vmem>>, vector<1x128xf32>
    %4 = vector.broadcast %3 : vector<1x128xf32> to vector<8x128xf32>
    %5 = arith.addf %2, %4 : vector<8x128xf32>
    %cst_5 = arith.constant 0.000000e+00 : f32
    %6 = vector.broadcast %cst_5 : f32 to vector<8x128xf32>
    %7 = arith.maximumf %5, %6 : vector<8x128xf32>
    %c0_6 = arith.constant 0 : index
    %c0_7 = arith.constant 0 : index
    %8 = vector.load %arg4[%c0_6, %c0_7] : memref<128x128xf32, #tpu.memory_space<vmem>>, vector<128x128xf32>
    %cst_8 = arith.constant dense<0.000000e+00> : vector<8x128xf32>
    %9 = tpu.matmul %7, %8, %cst_8 {dimension_numbers = #tpu.dot_dimension_numbers<[1], [0], [0], [1], [0, 0, 1, 1], [], []>} : vector<8x128xf32>, vector<128x128xf32>, vector<8x128xf32> -> vector<8x128xf32>
    %c0_9 = arith.constant 0 : index
    %c0_10 = arith.constant 0 : index
    %10 = vector.load %arg5[%c0_9, %c0_10] : memref<1x128xf32, #tpu.memory_space<vmem>>, vector<1x128xf32>
    %11 = vector.broadcast %10 : vector<1x128xf32> to vector<8x128xf32>
    %12 = arith.addf %9, %11 : vector<8x128xf32>
    %cst_11 = arith.constant 0.000000e+00 : f32
    %13 = vector.broadcast %cst_11 : f32 to vector<8x128xf32>
    %14 = arith.maximumf %12, %13 : vector<8x128xf32>
    %c0_12 = arith.constant 0 : index
    %c0_13 = arith.constant 0 : index
    %15 = vector.load %arg6[%c0_12, %c0_13] : memref<128x2xf32, #tpu.memory_space<vmem>>, vector<128x2xf32>
    %cst_14 = arith.constant dense<0.000000e+00> : vector<8x2xf32>
    %16 = tpu.matmul %14, %15, %cst_14 {dimension_numbers = #tpu.dot_dimension_numbers<[1], [0], [0], [1], [0, 0, 1, 1], [], []>} : vector<8x128xf32>, vector<128x2xf32>, vector<8x2xf32> -> vector<8x2xf32>
    %c0_15 = arith.constant 0 : index
    %c0_16 = arith.constant 0 : index
    %17 = vector.load %arg7[%c0_15, %c0_16] : memref<1x2xf32, #tpu.memory_space<vmem>>, vector<1x2xf32>
    %18 = vector.broadcast %17 : vector<1x2xf32> to vector<8x2xf32>
    %19 = arith.addf %16, %18 : vector<8x2xf32>
    %cst_17 = arith.constant dense<0xFF800000> : vector<8xf32>
    %20 = vector.multi_reduction <maximumf>, %19, %cst_17 [1] : vector<8x2xf32> to vector<8xf32>
    %21 = vector.shape_cast %20 : vector<8xf32> to vector<8x1xf32>
    %22 = vector.broadcast %21 : vector<8x1xf32> to vector<8x2xf32>
    %23 = arith.subf %19, %22 : vector<8x2xf32>
    %24 = math.exp %23 : vector<8x2xf32>
    %cst_18 = arith.constant dense<0.000000e+00> : vector<8xf32>
    %25 = vector.multi_reduction <add>, %24, %cst_18 [1] : vector<8x2xf32> to vector<8xf32>
    %26 = vector.shape_cast %25 : vector<8xf32> to vector<8x1xf32>
    %27 = math.log %26 : vector<8x1xf32>
    %28 = arith.addf %27, %21 : vector<8x1xf32>
    %29 = vector.broadcast %28 : vector<8x1xf32> to vector<8x2xf32>
    %30 = arith.subf %19, %29 : vector<8x2xf32>
    %c0_19 = arith.constant 0 : index
    %c0_20 = arith.constant 0 : index
    %31 = vector.load %arg8[%c0_19, %c0_20] : memref<8x2xf32, #tpu.memory_space<vmem>>, vector<8x2xf32>
    tpu.vector_store %arg8[%c0_19, %c0_20], %30 {strides = array<i32>} : memref<8x2xf32, #tpu.memory_space<vmem>>, vector<8x2xf32>,
    return
  }
  func.func @transform_0(%arg0: i32) -> (i32, i32) {
    %c0_i32 = arith.constant 0 : i32
    %c0_i32_0 = arith.constant 0 : i32
    return %arg0, %c0_i32 : i32, i32
  }
  func.func @transform_1(%arg0: i32) -> (i32, i32) {
    %c0_i32 = arith.constant 0 : i32
    %c0_i32_0 = arith.constant 0 : i32
    %c0_i32_1 = arith.constant 0 : i32
    return %c0_i32, %c0_i32_0 : i32, i32
  }
  func.func @transform_2(%arg0: i32) -> (i32, i32) {
    %c0_i32 = arith.constant 0 : i32
    %c0_i32_0 = arith.constant 0 : i32
    %c0_i32_1 = arith.constant 0 : i32
    return %c0_i32, %c0_i32_0 : i32, i32
  }
  func.func @transform_3(%arg0: i32) -> (i32, i32) {
    %c0_i32 = arith.constant 0 : i32
    %c0_i32_0 = arith.constant 0 : i32
    %c0_i32_1 = arith.constant 0 : i32
    return %c0_i32, %c0_i32_0 : i32, i32
  }
  func.func @transform_4(%arg0: i32) -> (i32, i32) {
    %c0_i32 = arith.constant 0 : i32
    %c0_i32_0 = arith.constant 0 : i32
    %c0_i32_1 = arith.constant 0 : i32
    return %c0_i32, %c0_i32_0 : i32, i32
  }
  func.func @transform_5(%arg0: i32) -> (i32, i32) {
    %c0_i32 = arith.constant 0 : i32
    %c0_i32_0 = arith.constant 0 : i32
    %c0_i32_1 = arith.constant 0 : i32
    return %c0_i32, %c0_i32_0 : i32, i32
  }
  func.func @transform_6(%arg0: i32) -> (i32, i32) {
    %c0_i32 = arith.constant 0 : i32
    %c0_i32_0 = arith.constant 0 : i32
    %c0_i32_1 = arith.constant 0 : i32
    return %c0_i32, %c0_i32_0 : i32, i32
  }
  func.func @transform_7(%arg0: i32) -> (i32, i32) {
    %c0_i32 = arith.constant 0 : i32
    %c0_i32_0 = arith.constant 0 : i32
    return %arg0, %c0_i32 : i32, i32
  }
}

</mosaic_0001>

<llo_original>
// kernel: net_forward.1
$region0: #{net_forward.1}
  #allocation0 [shape = 'u32[]', space=smem, size = 0x4, offset = 0x4, fixed_abs, tag = 'smem constant byte address 0x4 - core index']
  #allocation1 [shape = 'u32[72,128]{1,0:T(1,128)}', space=vmem, size = 0x9000, scoped, tag = 'internal scratch']
  %s0 = inlined_call_operand.hbm [shape: f32[8,7], index: 0, kind: input, shape index: {}]
  %s1 = inlined_call_operand.hbm [shape: f32[7,128], index: 1, kind: input, shape index: {}]
  %s2 = inlined_call_operand.vmem [shape: f32[1,128], index: 2, kind: input, shape index: {}]
  %s3 = inlined_call_operand.vmem [shape: f32[128,128], index: 3, kind: input, shape index: {}]
  %s4 = inlined_call_operand.vmem [shape: f32[1,128], index: 4, kind: input, shape index: {}]
  %s5 = inlined_call_operand.vmem [shape: f32[128,2], index: 5, kind: input, shape index: {}]
  %s6 = inlined_call_operand.vmem [shape: f32[1,2], index: 6, kind: input, shape index: {}]
  %s7 = inlined_call_operand.vmem [shape: f32[8,2], index: 7, kind: output, shape index: {}]
  %s8 = sld [smem:[#allocation0]]
  $region46: #{net_forward.1} parent=0
    _
  %s10 = ssub.s32 1, %s8
  %s11 = scalar_select 0, %s10, %s8
  $region1: #{net_forward.1} parent=0
    #allocation2 [shape = 'u8[4096]{0}', space=vmem, size = 0x1000, scoped, tag = 'input window, operand 0, single buffered']
    #allocation3 [shape = 's32[1]{0}', space=sflag, size = 0x4, scoped, tag = 'scoped memory for net_forward.1']
    #allocation4 [shape = 'u8[4096]{0}', space=vmem, size = 0x1000, scoped, tag = 'input window, operand 1, single buffered']
    #allocation5 [shape = 's32[1]{0}', space=sflag, size = 0x4, scoped, tag = 'scoped memory for net_forward.1']
    %12 = vsyncpa [#allocation3], 0
    %13 = vsyncpa [#allocation5], 0
    // Predicated region
    $region2: #{net_forward.1} parent=1 // pred_check
      _
    $region3: #{net_forward.1} parent=1 // pred_check_branch
      %15 = sbr.rel (0) target = $region5
    $region4: #{net_forward.1} parent=1 // pred_region
      %17 = vsyncadd [#allocation3], 0
      %s19 = sshll.u32 %s0, 4
      %s20 = int_to_ptr.hbm [resolvable:$true] %s19
      %s21 = sshll.u32 [#allocation2], 4
      %s22 = int_to_ptr.vmem [resolvable:$true] %s21
      %24 = dma.hbm_to_vmem [thread:$0]  %s20, 128, %s22, [#allocation3]
    $region5: #{net_forward.1} parent=1 // pred_fallthru
      _
    // Predicated region
    $region6: #{net_forward.1} parent=1 // pred_check
      _
    $region7: #{net_forward.1} parent=1 // pred_check_branch
      %26 = sbr.rel (0) target = $region9
    $region8: #{net_forward.1} parent=1 // pred_region
      %28 = vsyncadd [#allocation5], 0
      %s30 = sshll.u32 %s1, 4
      %s31 = int_to_ptr.hbm [resolvable:$true] %s30
      %s32 = sshll.u32 [#allocation4], 4
      %s33 = int_to_ptr.vmem [resolvable:$true] %s32
      %35 = dma.hbm_to_vmem [thread:$0]  %s31, 128, %s33, [#allocation5]
    $region9: #{net_forward.1} parent=1 // pred_fallthru
      _
    // Predicated region
    $region10: #{net_forward.1} parent=1 // pred_check
      _
    $region11: #{net_forward.1} parent=1 // pred_check_branch
      %37 = sbr.rel (0) target = $region13
    $region12: #{net_forward.1} parent=1 // pred_region
      _
    $region13: #{net_forward.1} parent=1 // pred_fallthru
      _
    // Predicated region
    $region14: #{net_forward.1} parent=1 // pred_check
      _
    $region15: #{net_forward.1} parent=1 // pred_check_branch
      %39 = sbr.rel (0) target = $region17
    $region16: #{net_forward.1} parent=1 // pred_region
      _
    $region17: #{net_forward.1} parent=1 // pred_fallthru
      _
    // Predicated region
    $region18: #{net_forward.1} parent=1 // pred_check
      _
    $region19: #{net_forward.1} parent=1 // pred_check_branch
      %41 = sbr.rel (0) target = $region21
    $region20: #{net_forward.1} parent=1 // pred_region
      _
    $region21: #{net_forward.1} parent=1 // pred_fallthru
      _
    // Predicated region
    $region22: #{net_forward.1} parent=1 // pred_check
      _
    $region23: #{net_forward.1} parent=1 // pred_check_branch
      %43 = sbr.rel (0) target = $region25
    $region24: #{net_forward.1} parent=1 // pred_region
      _
    $region25: #{net_forward.1} parent=1 // pred_fallthru
      _
    // Predicated region
    $region26: #{net_forward.1} parent=1 // pred_check
      _
    $region27: #{net_forward.1} parent=1 // pred_check_branch
      %45 = sbr.rel (0) target = $region29
    $region28: #{net_forward.1} parent=1 // pred_region
      _
    $region29: #{net_forward.1} parent=1 // pred_fallthru
      _
    // Predicated region
    $region30: #{net_forward.1} parent=1 // pred_check
      _
    $region31: #{net_forward.1} parent=1 // pred_check_branch
      %47 = sbr.rel (0) target = $region33
    $region32: #{net_forward.1} parent=1 // pred_region
      %49 = dma.done [#allocation3], 128
    $region33: #{net_forward.1} parent=1 // pred_fallthru
      _
    // Predicated region
    $region34: #{net_forward.1} parent=1 // pred_check
      _
    $region35: #{net_forward.1} parent=1 // pred_check_branch
      %51 = sbr.rel (0) target = $region37
    $region36: #{net_forward.1} parent=1 // pred_region
      %53 = dma.done [#allocation5], 128
    $region37: #{net_forward.1} parent=1 // pred_fallthru
      _
    %v54 = vld [vmem:[#allocation2] sm:$0xff]
    %v55 = vld [vmem:[#allocation4] sm:$0x7f]
    %v56 = vld [vmem:[%s2] sm:$0x1]
    %v58 = vperm.slane %v56, 0
    %vm60 = vcmask 56320
    %v62 = vsel %vm60, %v54, 0
    %vm64 = vcmask 1046528
    %v66 = vsel %vm64, %v55, 0
    %68 = vmatpush.msra.mxu0 0.0
    %69 = vmatpush.msra.mxu0 0.0
    %70 = vmatpush.msra.mxu0 0.0
    %71 = vmatpush.msra.mxu0 0.0
    %72 = vmatpush.msra.mxu0 0.0
    %73 = vmatpush.msra.mxu0 0.0
    %74 = vmatpush.msra.mxu0 0.0
    %75 = vmatpush.msra.mxu0 0.0
    %76 = vmatpush.msra.mxu0 0.0
    %77 = vmatpush.msra.mxu0 0.0
    %78 = vmatpush.msra.mxu0 0.0
    %79 = vmatpush.msra.mxu0 0.0
    %80 = vmatpush.msra.mxu0 0.0
    %81 = vmatpush.msra.mxu0 0.0
    %82 = vmatpush.msra.mxu0 0.0
    %83 = vmatpush.msra.mxu0 %v66
    %84 = vmatmul.f32.gmra.mxu0 %v62
    %v85 = vpop.f32.mrf.mxu0
    %v86 = vadd.f32 %v58, %v85
    %87 = vdwg.mxu0
    %v88 = vmax.f32 %v86, 0.0
    %v89 = vld [vmem:[%s3] sm:$0xff]
    %v90 = vld [vmem:[%s3 + $0x8] sm:$0xff]
    %v91 = vld [vmem:[%s3 + $0x10] sm:$0xff]
    %v92 = vld [vmem:[%s3 + $0x18] sm:$0xff]
    %v93 = vld [vmem:[%s3 + $0x20] sm:$0xff]
    %v94 = vld [vmem:[%s3 + $0x28] sm:$0xff]
    %v95 = vld [vmem:[%s3 + $0x30] sm:$0xff]
    %v96 = vld [vmem:[%s3 + $0x38] sm:$0xff]
    %v97 = vld [vmem:[%s3 + $0x40] sm:$0xff]
    %v98 = vld [vmem:[%s3 + $0x48] sm:$0xff]
    %v99 = vld [vmem:[%s3 + $0x50] sm:$0xff]
    %v100 = vld [vmem:[%s3 + $0x58] sm:$0xff]
    %v101 = vld [vmem:[%s3 + $0x60] sm:$0xff]
    %v102 = vld [vmem:[%s3 + $0x68] sm:$0xff]
    %v103 = vld [vmem:[%s3 + $0x70] sm:$0xff]
    %v104 = vld [vmem:[%s3 + $0x78] sm:$0xff]
    %v105 = vld [vmem:[%s4] sm:$0x1]
    %v107 = vperm.slane %v105, 0
    %109 = vmatpush.msra.mxu0 %v104
    %110 = vmatpush.msra.mxu0 %v103
    %111 = vmatpush.msra.mxu0 %v102
    %112 = vmatpush.msra.mxu0 %v101
    %113 = vmatpush.msra.mxu0 %v100
    %114 = vmatpush.msra.mxu0 %v99
    %115 = vmatpush.msra.mxu0 %v98
    %116 = vmatpush.msra.mxu0 %v97
    %117 = vmatpush.msra.mxu0 %v96
    %118 = vmatpush.msra.mxu0 %v95
    %119 = vmatpush.msra.mxu0 %v94
    %120 = vmatpush.msra.mxu0 %v93
    %121 = vmatpush.msra.mxu0 %v92
    %122 = vmatpush.msra.mxu0 %v91
    %123 = vmatpush.msra.mxu0 %v90
    %124 = vmatpush.msra.mxu0 %v89
    %125 = vmatmul.f32.gmra.mxu0 %v88
    %v126 = vpop.f32.mrf.mxu0
    %v127 = vadd.f32 %v107, %v126
    %128 = vdwg.mxu0
    %v129 = vmax.f32 %v127, 0.0
    %v130 = vld [vmem:[%s5] sm:$0xff]
    %v131 = vld [vmem:[%s5 + $0x8] sm:$0xff]
    %v132 = vld [vmem:[%s5 + $0x10] sm:$0xff]
    %v133 = vld [vmem:[%s5 + $0x18] sm:$0xff]
    %v134 = vld [vmem:[%s5 + $0x20] sm:$0xff]
    %v135 = vld [vmem:[%s5 + $0x28] sm:$0xff]
    %v136 = vld [vmem:[%s5 + $0x30] sm:$0xff]
    %v137 = vld [vmem:[%s5 + $0x38] sm:$0xff]
    %v138 = vld [vmem:[%s5 + $0x40] sm:$0xff]
    %v139 = vld [vmem:[%s5 + $0x48] sm:$0xff]
    %v140 = vld [vmem:[%s5 + $0x50] sm:$0xff]
    %v141 = vld [vmem:[%s5 + $0x58] sm:$0xff]
    %v142 = vld [vmem:[%s5 + $0x60] sm:$0xff]
    %v143 = vld [vmem:[%s5 + $0x68] sm:$0xff]
    %v144 = vld [vmem:[%s5 + $0x70] sm:$0xff]
    %v145 = vld [vmem:[%s5 + $0x78] sm:$0xff]
    %v146 = vld [vmem:[%s6] sm:$0x1]
    %v148 = vperm.slane %v146, 0
    %150 = vmatpush.msra.mxu0 %v145
    %151 = vmatpush.msra.mxu0 %v144
    %152 = vmatpush.msra.mxu0 %v143
    %153 = vmatpush.msra.mxu0 %v142
    %154 = vmatpush.msra.mxu0 %v141
    %155 = vmatpush.msra.mxu0 %v140
    %156 = vmatpush.msra.mxu0 %v139
    %157 = vmatpush.msra.mxu0 %v138
    %158 = vmatpush.msra.mxu0 %v137
    %159 = vmatpush.msra.mxu0 %v136
    %160 = vmatpush.msra.mxu0 %v135
    %161 = vmatpush.msra.mxu0 %v134
    %162 = vmatpush.msra.mxu0 %v133
    %163 = vmatpush.msra.mxu0 %v132
    %164 = vmatpush.msra.mxu0 %v131
    %165 = vmatpush.msra.mxu0 %v130
    %166 = vmatmul.f32.gmra.mxu0 %v129
    %v167 = vpop.f32.mrf.mxu0
    %v168 = vadd.f32 %v148, %v167
    %169 = vdwg.mxu0
    %vm170 = vcmask 15360
    %v171 = vsel %vm170, %v168, -inf
    %172 = vmax.xlane.f32.xlu0 %v171
    %v173 = vpop.xlane.xlu0 %172
    %v174 = vsub.f32 %v168, %v173
    %v175 = vmul.f32 %v174, 1.442695
    %v176 = vpow.pop %v175
    %v177 = vsel %vm170, %v176, 0.0
    %178 = vadd.xlane.f32.xlu0 %v177
    %v179 = vpop.xlane.xlu0 %178
    %v180 = vlog2.pop %v179
    %v181 = vmul.f32 %v180, 0.6931472
    %v182 = vadd.f32 %v181, %v173
    %v183 = vsub.f32 %v168, %v182
    %184 = vst.msk [vmem:[%s7] sm:$0xff] %vm170, %v183
    // Predicated region
    $region38: #{net_forward.1} parent=1 // pred_check
      _
    $region39: #{net_forward.1} parent=1 // pred_check_branch
      %186 = sbr.rel (0) target = $region41
    $region40: #{net_forward.1} parent=1 // pred_region
      _
    $region41: #{net_forward.1} parent=1 // pred_fallthru
      _
    // Predicated region
    $region42: #{net_forward.1} parent=1 // pred_check
      _
    $region43: #{net_forward.1} parent=1 // pred_check_branch
      %188 = sbr.rel (0) target = $region45
    $region44: #{net_forward.1} parent=1 // pred_region
      _
    $region45: #{net_forward.1} parent=1 // pred_fallthru
      _
    %189 = vsyncpa [#allocation3], 1
    %190 = vsyncpa [#allocation5], 1

</llo_original>
